<compile_context>
chip_gen: v7x
topology: tpu7x:2x2x1
jax: 0.10.0
libtpu: 0.0.40
codegen_flags: <defaults>
</compile_context>

<pallas_src>
import numpy as np
import jax
import jax.numpy as jnp
from jax.experimental import pallas as pl
from jax.experimental.pallas import tpu as pltpu


def _round_up(v, m):
    return (v + m - 1) // m * m


def _softplus(v):
    # Matches torch.nn.Softplus(beta=1, threshold=20).
    return jnp.where(v > 20.0, v, jnp.log1p(jnp.exp(jnp.minimum(v, 20.0))))


def _vae_dense_kernel(
    x_ref, eps_ref,                  # streamed per batch tile
    w_e1, b_e1, w_e2, b_e2,          # encoder (VMEM-resident)
    w_z, b_z,                        # fused [z_mean | z_logvar] head
    w_d1, b_d1, w_d2, b_d2,          # decoder
    w_x, b_x,                        # fused [x_mean | x_logvar] head
    out_ref,                         # single slab: [z_mean|z_logvar|x_mean|x_logvar|x_hat]
):
    f32 = jnp.float32

    def dense(a, w_ref, b_ref):
        w = w_ref[...]
        # Cast activations to the weight dtype (bf16 on v6e/v7x if requested);
        # always accumulate in f32 on the MXU, elementwise math stays f32.
        return jnp.dot(a.astype(w.dtype), w, preferred_element_type=f32) + b_ref[...]

    x = x_ref[...]
    eps = eps_ref[...]

    # encoder: Linear -> ReLU -> Linear -> ReLU
    h = jnp.maximum(dense(x, w_e1, b_e1), 0.0)
    h = jnp.maximum(dense(h, w_e2, b_e2), 0.0)

    # fused latent heads (single matmul for mean + logvar)
    z_head = dense(h, w_z, b_z)
    z_dim = z_head.shape[-1] // 2
    z_mean = z_head[:, :z_dim]
    z_logvar = _softplus(z_head[:, z_dim:])

    eps_z = eps[:, :z_dim]
    eps_x = eps[:, z_dim:]

    # reparameterize: z = mu + exp(0.5 * logvar) * eps
    z = z_mean + jnp.exp(0.5 * z_logvar) * eps_z

    # decoder: Linear -> ReLU -> Linear -> ReLU
    hz = jnp.maximum(dense(z, w_d1, b_d1), 0.0)
    hz = jnp.maximum(dense(hz, w_d2, b_d2), 0.0)

    # fused reconstruction heads
    x_head = dense(hz, w_x, b_x)
    win = x_head.shape[-1] // 2
    x_mean = x_head[:, :win]
    x_logvar = _softplus(x_head[:, win:])
    x_hat = x_mean + jnp.exp(0.5 * x_logvar) * eps_x

    # single lane-dense output slab, written via direct static sub-slice stores
    od = out_ref.dtype
    out_ref[:, :z_dim] = z_mean.astype(od)
    out_ref[:, z_dim:2 * z_dim] = z_logvar.astype(od)
    out_ref[:, 2 * z_dim:2 * z_dim + win] = x_mean.astype(od)
    out_ref[:, 2 * z_dim + win:2 * z_dim + 2 * win] = x_logvar.astype(od)
    out_ref[:, 2 * z_dim + 2 * win:] = x_hat.astype(od)


def init_params(key, window_size, h_dim, z_dim):
    """PyTorch-Linear-style init. Weights stored transposed, i.e. (in, out)."""
    def linear(key, fan_in, fan_out):
        kw, kb = jax.random.split(key)
        bound = 1.0 / np.sqrt(fan_in)
        w = jax.random.uniform(kw, (fan_in, fan_out), jnp.float32, -bound, bound)
        b = jax.random.uniform(kb, (1, fan_out), jnp.float32, -bound, bound)
        return w, b

    keys = jax.random.split(key, 8)
    w_e1, b_e1 = linear(keys[0], window_size, h_dim)
    w_e2, b_e2 = linear(keys[1], h_dim, h_dim)
    w_zm, b_zm = linear(keys[2], h_dim, z_dim)
    w_zl, b_zl = linear(keys[3], h_dim, z_dim)
    w_d1, b_d1 = linear(keys[4], z_dim, h_dim)
    w_d2, b_d2 = linear(keys[5], h_dim, h_dim)
    w_xm, b_xm = linear(keys[6], h_dim, window_size)
    w_xl, b_xl = linear(keys[7], h_dim, window_size)
    return (w_e1, b_e1, w_e2, b_e2, w_zm, b_zm, w_zl, b_zl,
            w_d1, b_d1, w_d2, b_d2, w_xm, b_xm, w_xl, b_xl)


def vae_dense_forward(x, eps, params, *, matmul_dtype=jnp.float32,
                      out_dtype=jnp.float32, block_batch=None):
    """x: (batch, window_size); eps: (batch, z_dim + window_size) noise slab."""
    (w_e1, b_e1, w_e2, b_e2, w_zm, b_zm, w_zl, b_zl,
     w_d1, b_d1, w_d2, b_d2, w_xm, b_xm, w_xl, b_xl) = params

    batch, window_size = x.shape
    h_dim = w_e1.shape[1]
    z_dim = w_zm.shape[1]
    out_w = 2 * z_dim + 3 * window_size
    out_dtype = jnp.dtype(out_dtype)

    # ---- fuse paired heads into single (wider) matmuls in the wrapper ----
    w_z = jnp.concatenate([w_zm, w_zl], axis=1).astype(matmul_dtype)
    b_z = jnp.concatenate([b_zm, b_zl], axis=1)
    w_x = jnp.concatenate([w_xm, w_xl], axis=1).astype(matmul_dtype)
    b_x = jnp.concatenate([b_xm, b_xl], axis=1)
    weights = (w_e1.astype(matmul_dtype), b_e1, w_e2.astype(matmul_dtype), b_e2,
               w_z, b_z,
               w_d1.astype(matmul_dtype), b_d1, w_d2.astype(matmul_dtype), b_d2,
               w_x, b_x)

    # sublane multiple: 8 for pure-f32 streams, 16 if any bf16 stream involved
    row_mult = 16 if (jnp.dtype(matmul_dtype) == jnp.bfloat16
                      or out_dtype == jnp.bfloat16) else 8

    # ---- batch tile selection: big tiles (overhead/HBM-bound kernel) ----
    if block_batch is None:
        if batch <= 1024:
            tb = _round_up(max(batch, row_mult), row_mult)
        else:
            # keep >= 2 grid steps so the "parallel" batch axis can be split
            # across v7x's two TensorCores; tiles rounded to 128 rows.
            tb = min(_round_up(pl.cdiv(batch, 2), 128), 8192)
    else:
        tb = _round_up(block_batch, row_mult)

    # ---- VMEM budget: weights + double-buffered streams + all intermediates ----
    wbytes = sum(int(np.prod(a.shape)) * a.dtype.itemsize for a in weights)
    stream_row = (4 * window_size + 4 * (z_dim + window_size)
                  + out_dtype.itemsize * out_w)               # x + eps + out slab, per row
    act_row = 4 * (4 * h_dim + 4 * z_dim + 4 * window_size + out_w)  # h/hz/z_head/x_head/z/temps
    budget = 24 * 1024 * 1024
    max_rows = max((budget - 2 * wbytes) // (2 * stream_row + act_row), row_mult)
    tb = int(min(tb, (max_rows // row_mult) * row_mult))

    padded = _round_up(batch, tb)
    if padded != batch:
        pad = padded - batch
        x = jnp.pad(x, ((0, pad), (0, 0)))
        eps = jnp.pad(eps, ((0, pad), (0, 0)))
    grid = (padded // tb,)

    need = 2 * wbytes + 2 * tb * stream_row + tb * act_row
    # cap at 32 MiB: safe for v7x (64 MiB physical / 32 MiB scoped default)
    vmem_limit = int(min(max(2 * need, 16 * 1024 * 1024), 32 * 1024 * 1024))

    def batch_spec(dim):
        return pl.BlockSpec((tb, dim), lambda i: (i, 0))

    def resident_spec(arr):
        # Constant block index -> fetched once, stays VMEM-resident across steps.
        return pl.BlockSpec(arr.shape, lambda i: (0, 0))

    in_specs = [batch_spec(window_size), batch_spec(z_dim + window_size)]
    in_specs += [resident_spec(a) for a in weights]

    out_slab = pl.pallas_call(
        _vae_dense_kernel,
        grid=grid,
        in_specs=in_specs,
        out_specs=batch_spec(out_w),
        out_shape=jax.ShapeDtypeStruct((padded, out_w), out_dtype),
        compiler_params=pltpu.CompilerParams(
            dimension_semantics=("parallel",),   # batch axis -> megacore-shardable
            vmem_limit_bytes=vmem_limit,
        ),
    )(x, eps, *weights)

    z_mean = out_slab[:batch, :z_dim]
    z_logvar = out_slab[:batch, z_dim:2 * z_dim]
    x_mean = out_slab[:batch, 2 * z_dim:2 * z_dim + window_size]
    x_logvar = out_slab[:batch, 2 * z_dim + window_size:2 * z_dim + 2 * window_size]
    x_hat = out_slab[:batch, 2 * z_dim + 2 * window_size:]
    return x_hat, z_mean, z_logvar, x_mean, x_logvar


def vae_dense_reference(x, eps_z, eps_x, params):
    """Pure-JAX reference for correctness checking."""
    (w_e1, b_e1, w_e2, b_e2, w_zm, b_zm, w_zl, b_zl,
     w_d1, b_d1, w_d2, b_d2, w_xm, b_xm, w_xl, b_xl) = params
    sp = lambda v: jnp.where(v > 20.0, v, jnp.log1p(jnp.exp(jnp.minimum(v, 20.0))))
    h = jnp.maximum(x @ w_e1 + b_e1, 0.0)
    h = jnp.maximum(h @ w_e2 + b_e2, 0.0)
    z_mean = h @ w_zm + b_zm
    z_logvar = sp(h @ w_zl + b_zl)
    z = z_mean + jnp.exp(0.5 * z_logvar) * eps_z
    hz = jnp.maximum(z @ w_d1 + b_d1, 0.0)
    hz = jnp.maximum(hz @ w_d2 + b_d2, 0.0)
    x_mean = hz @ w_xm + b_xm
    x_logvar = sp(hz @ w_xl + b_xl)
    x_hat = x_mean + jnp.exp(0.5 * x_logvar) * eps_x
    return x_hat, z_mean, z_logvar, x_mean, x_logvar


if __name__ == "__main__":
    window_size, h_dim, z_dim = 16, 32, 8

    key = jax.random.PRNGKey(0)
    k_p, k1, k2, k3 = jax.random.split(key, 4)
    params = init_params(k_p, window_size, h_dim, z_dim)

    def make_case(k, batch):
        kx, ke = jax.random.split(k)
        x = jax.random.normal(kx, (batch, window_size), jnp.float32)
        # single noise slab [eps_z | eps_x] (fewer input streams per grid step)
        eps = jax.random.normal(ke, (batch, z_dim + window_size), jnp.float32)
        return x, eps

    def check(outs, refs, rtol, atol):
        for o, r in zip(outs, refs):
            np.testing.assert_allclose(np.asarray(o, dtype=np.float32),
                                       np.asarray(r), rtol=rtol, atol=atol)

    # --- case 1: tiny batch (padded to 8), single grid step, f32 path ---
    x1, eps1 = make_case(k1, 4)
    outs1 = jax.block_until_ready(vae_dense_forward(x1, eps1, params))
    refs1 = vae_dense_reference(x1, eps1[:, :z_dim], eps1[:, z_dim:], params)
    check(outs1, refs1, 1e-4, 1e-4)

    # --- case 2: multi-step grid (batch=40, block=16 -> padded 48, grid=(3,)) ---
    x2, eps2 = make_case(k2, 40)
    outs2 = jax.block_until_ready(
        vae_dense_forward(x2, eps2, params, block_batch=16))
    refs2 = vae_dense_reference(x2, eps2[:, :z_dim], eps2[:, z_dim:], params)
    check(outs2, refs2, 1e-4, 1e-4)

    # --- case 3: default (large) tile selection with padding, f32 ---
    x3, eps3 = make_case(k3, 300)
    outs3 = jax.block_until_ready(vae_dense_forward(x3, eps3, params))
    refs3 = vae_dense_reference(x3, eps3[:, :z_dim], eps3[:, z_dim:], params)
    check(outs3, refs3, 1e-4, 1e-4)

    # --- case 4: bf16-streamed output slab (v6e/v7x bandwidth option),
    #             all math inside the kernel stays f32 ---
    outs4 = jax.block_until_ready(
        vae_dense_forward(x3, eps3, params, out_dtype=jnp.bfloat16))
    check(outs4, refs3, 5e-2, 5e-2)

    print("KERNEL_OK")
</pallas_src>

<mosaic_0001>
module attributes {stable_mosaic.version = 11 : i64} {
  func.func @_vae_dense_kernel(%arg0: i32, %arg1: memref<8x16xf32, #tpu.memory_space<vmem>>, %arg2: memref<8x24xf32, #tpu.memory_space<vmem>>, %arg3: memref<16x32xf32, #tpu.memory_space<vmem>>, %arg4: memref<1x32xf32, #tpu.memory_space<vmem>>, %arg5: memref<32x32xf32, #tpu.memory_space<vmem>>, %arg6: memref<1x32xf32, #tpu.memory_space<vmem>>, %arg7: memref<32x16xf32, #tpu.memory_space<vmem>>, %arg8: memref<1x16xf32, #tpu.memory_space<vmem>>, %arg9: memref<8x32xf32, #tpu.memory_space<vmem>>, %arg10: memref<1x32xf32, #tpu.memory_space<vmem>>, %arg11: memref<32x32xf32, #tpu.memory_space<vmem>>, %arg12: memref<1x32xf32, #tpu.memory_space<vmem>>, %arg13: memref<32x32xf32, #tpu.memory_space<vmem>>, %arg14: memref<1x32xf32, #tpu.memory_space<vmem>>, %arg15: memref<8x64xf32, #tpu.memory_space<vmem>>) attributes {dimension_semantics = [#tpu.dimension_semantics<parallel>], iteration_bounds = array<i64: 1>, scalar_prefetch = 0 : i64, scratch_operands = 0 : i64, tpu.core_type = #tpu.core_type<tc>, window_params = [{transform_indices = @transform_0, window_bounds = array<i64: 8, 16>}, {transform_indices = @transform_1, window_bounds = array<i64: 8, 24>}, {pipeline_mode = #tpu.pipeline_mode<synchronous>, transform_indices = @transform_2, window_bounds = array<i64: 16, 32>}, {pipeline_mode = #tpu.pipeline_mode<synchronous>, transform_indices = @transform_3, window_bounds = array<i64: 1, 32>}, {pipeline_mode = #tpu.pipeline_mode<synchronous>, transform_indices = @transform_4, window_bounds = array<i64: 32, 32>}, {pipeline_mode = #tpu.pipeline_mode<synchronous>, transform_indices = @transform_5, window_bounds = array<i64: 1, 32>}, {pipeline_mode = #tpu.pipeline_mode<synchronous>, transform_indices = @transform_6, window_bounds = array<i64: 32, 16>}, {pipeline_mode = #tpu.pipeline_mode<synchronous>, transform_indices = @transform_7, window_bounds = array<i64: 1, 16>}, {pipeline_mode = #tpu.pipeline_mode<synchronous>, transform_indices = @transform_8, window_bounds = array<i64: 8, 32>}, {pipeline_mode = #tpu.pipeline_mode<synchronous>, transform_indices = @transform_9, window_bounds = array<i64: 1, 32>}, {pipeline_mode = #tpu.pipeline_mode<synchronous>, transform_indices = @transform_10, window_bounds = array<i64: 32, 32>}, {pipeline_mode = #tpu.pipeline_mode<synchronous>, transform_indices = @transform_11, window_bounds = array<i64: 1, 32>}, {pipeline_mode = #tpu.pipeline_mode<synchronous>, transform_indices = @transform_12, window_bounds = array<i64: 32, 32>}, {pipeline_mode = #tpu.pipeline_mode<synchronous>, transform_indices = @transform_13, window_bounds = array<i64: 1, 32>}, {transform_indices = @transform_14, window_bounds = array<i64: 8, 64>}]} {
    %c0 = arith.constant 0 : index
    %c0_0 = arith.constant 0 : index
    %0 = vector.load %arg1[%c0, %c0_0] : memref<8x16xf32, #tpu.memory_space<vmem>>, vector<8x16xf32>
    %c0_1 = arith.constant 0 : index
    %c0_2 = arith.constant 0 : index
    %1 = vector.load %arg2[%c0_1, %c0_2] : memref<8x24xf32, #tpu.memory_space<vmem>>, vector<8x24xf32>
    %c0_3 = arith.constant 0 : index
    %c0_4 = arith.constant 0 : index
    %2 = vector.load %arg3[%c0_3, %c0_4] : memref<16x32xf32, #tpu.memory_space<vmem>>, vector<16x32xf32>
    %cst = arith.constant dense<0.000000e+00> : vector<8x32xf32>
    %3 = tpu.matmul %0, %2, %cst {dimension_numbers = #tpu.dot_dimension_numbers<[1], [0], [0], [1], [0, 0, 1, 1], [], []>} : vector<8x16xf32>, vector<16x32xf32>, vector<8x32xf32> -> vector<8x32xf32>
    %c0_5 = arith.constant 0 : index
    %c0_6 = arith.constant 0 : index
    %4 = vector.load %arg4[%c0_5, %c0_6] : memref<1x32xf32, #tpu.memory_space<vmem>>, vector<1x32xf32>
    %5 = vector.broadcast %4 : vector<1x32xf32> to vector<8x32xf32>
    %6 = arith.addf %3, %5 : vector<8x32xf32>
    %cst_7 = arith.constant 0.000000e+00 : f32
    %7 = vector.broadcast %cst_7 : f32 to vector<8x32xf32>
    %8 = arith.maximumf %6, %7 : vector<8x32xf32>
    %c0_8 = arith.constant 0 : index
    %c0_9 = arith.constant 0 : index
    %9 = vector.load %arg5[%c0_8, %c0_9] : memref<32x32xf32, #tpu.memory_space<vmem>>, vector<32x32xf32>
    %cst_10 = arith.constant dense<0.000000e+00> : vector<8x32xf32>
    %10 = tpu.matmul %8, %9, %cst_10 {dimension_numbers = #tpu.dot_dimension_numbers<[1], [0], [0], [1], [0, 0, 1, 1], [], []>} : vector<8x32xf32>, vector<32x32xf32>, vector<8x32xf32> -> vector<8x32xf32>
    %c0_11 = arith.constant 0 : index
    %c0_12 = arith.constant 0 : index
    %11 = vector.load %arg6[%c0_11, %c0_12] : memref<1x32xf32, #tpu.memory_space<vmem>>, vector<1x32xf32>
    %12 = vector.broadcast %11 : vector<1x32xf32> to vector<8x32xf32>
    %13 = arith.addf %10, %12 : vector<8x32xf32>
    %cst_13 = arith.constant 0.000000e+00 : f32
    %14 = vector.broadcast %cst_13 : f32 to vector<8x32xf32>
    %15 = arith.maximumf %13, %14 : vector<8x32xf32>
    %c0_14 = arith.constant 0 : index
    %c0_15 = arith.constant 0 : index
    %16 = vector.load %arg7[%c0_14, %c0_15] : memref<32x16xf32, #tpu.memory_space<vmem>>, vector<32x16xf32>
    %cst_16 = arith.constant dense<0.000000e+00> : vector<8x16xf32>
    %17 = tpu.matmul %15, %16, %cst_16 {dimension_numbers = #tpu.dot_dimension_numbers<[1], [0], [0], [1], [0, 0, 1, 1], [], []>} : vector<8x32xf32>, vector<32x16xf32>, vector<8x16xf32> -> vector<8x16xf32>
    %c0_17 = arith.constant 0 : index
    %c0_18 = arith.constant 0 : index
    %18 = vector.load %arg8[%c0_17, %c0_18] : memref<1x16xf32, #tpu.memory_space<vmem>>, vector<1x16xf32>
    %19 = vector.broadcast %18 : vector<1x16xf32> to vector<8x16xf32>
    %20 = arith.addf %17, %19 : vector<8x16xf32>
    %21 = vector.extract_strided_slice %20 {offsets = [0, 0], sizes = [8, 8], strides = [1, 1]} : vector<8x16xf32> to vector<8x8xf32>
    %22 = vector.extract_strided_slice %20 {offsets = [0, 8], sizes = [8, 8], strides = [1, 1]} : vector<8x16xf32> to vector<8x8xf32>
    %cst_19 = arith.constant 2.000000e+01 : f32
    %23 = vector.broadcast %cst_19 : f32 to vector<8x8xf32>
    %24 = arith.cmpf ogt, %22, %23 : vector<8x8xf32>
    %cst_20 = arith.constant 2.000000e+01 : f32
    %25 = vector.broadcast %cst_20 : f32 to vector<8x8xf32>
    %26 = arith.minimumf %22, %25 : vector<8x8xf32>
    %27 = math.exp %26 : vector<8x8xf32>
    %28 = math.log1p %27 : vector<8x8xf32>
    %29 = arith.select %24, %22, %28 : vector<8x8xi1>, vector<8x8xf32>
    %30 = vector.extract_strided_slice %1 {offsets = [0, 0], sizes = [8, 8], strides = [1, 1]} : vector<8x24xf32> to vector<8x8xf32>
    %31 = vector.extract_strided_slice %1 {offsets = [0, 8], sizes = [8, 16], strides = [1, 1]} : vector<8x24xf32> to vector<8x16xf32>
    %cst_21 = arith.constant 5.000000e-01 : f32
    %32 = vector.broadcast %cst_21 : f32 to vector<8x8xf32>
    %33 = arith.mulf %32, %29 : vector<8x8xf32>
    %34 = math.exp %33 : vector<8x8xf32>
    %35 = arith.mulf %34, %30 : vector<8x8xf32>
    %36 = arith.addf %21, %35 : vector<8x8xf32>
    %c0_22 = arith.constant 0 : index
    %c0_23 = arith.constant 0 : index
    %37 = vector.load %arg9[%c0_22, %c0_23] : memref<8x32xf32, #tpu.memory_space<vmem>>, vector<8x32xf32>
    %cst_24 = arith.constant dense<0.000000e+00> : vector<8x32xf32>
    %38 = tpu.matmul %36, %37, %cst_24 {dimension_numbers = #tpu.dot_dimension_numbers<[1], [0], [0], [1], [0, 0, 1, 1], [], []>} : vector<8x8xf32>, vector<8x32xf32>, vector<8x32xf32> -> vector<8x32xf32>
    %c0_25 = arith.constant 0 : index
    %c0_26 = arith.constant 0 : index
    %39 = vector.load %arg10[%c0_25, %c0_26] : memref<1x32xf32, #tpu.memory_space<vmem>>, vector<1x32xf32>
    %40 = vector.broadcast %39 : vector<1x32xf32> to vector<8x32xf32>
    %41 = arith.addf %38, %40 : vector<8x32xf32>
    %cst_27 = arith.constant 0.000000e+00 : f32
    %42 = vector.broadcast %cst_27 : f32 to vector<8x32xf32>
    %43 = arith.maximumf %41, %42 : vector<8x32xf32>
    %c0_28 = arith.constant 0 : index
    %c0_29 = arith.constant 0 : index
    %44 = vector.load %arg11[%c0_28, %c0_29] : memref<32x32xf32, #tpu.memory_space<vmem>>, vector<32x32xf32>
    %cst_30 = arith.constant dense<0.000000e+00> : vector<8x32xf32>
    %45 = tpu.matmul %43, %44, %cst_30 {dimension_numbers = #tpu.dot_dimension_numbers<[1], [0], [0], [1], [0, 0, 1, 1], [], []>} : vector<8x32xf32>, vector<32x32xf32>, vector<8x32xf32> -> vector<8x32xf32>
    %c0_31 = arith.constant 0 : index
    %c0_32 = arith.constant 0 : index
    %46 = vector.load %arg12[%c0_31, %c0_32] : memref<1x32xf32, #tpu.memory_space<vmem>>, vector<1x32xf32>
    %47 = vector.broadcast %46 : vector<1x32xf32> to vector<8x32xf32>
    %48 = arith.addf %45, %47 : vector<8x32xf32>
    %cst_33 = arith.constant 0.000000e+00 : f32
    %49 = vector.broadcast %cst_33 : f32 to vector<8x32xf32>
    %50 = arith.maximumf %48, %49 : vector<8x32xf32>
    %c0_34 = arith.constant 0 : index
    %c0_35 = arith.constant 0 : index
    %51 = vector.load %arg13[%c0_34, %c0_35] : memref<32x32xf32, #tpu.memory_space<vmem>>, vector<32x32xf32>
    %cst_36 = arith.constant dense<0.000000e+00> : vector<8x32xf32>
    %52 = tpu.matmul %50, %51, %cst_36 {dimension_numbers = #tpu.dot_dimension_numbers<[1], [0], [0], [1], [0, 0, 1, 1], [], []>} : vector<8x32xf32>, vector<32x32xf32>, vector<8x32xf32> -> vector<8x32xf32>
    %c0_37 = arith.constant 0 : index
    %c0_38 = arith.constant 0 : index
    %53 = vector.load %arg14[%c0_37, %c0_38] : memref<1x32xf32, #tpu.memory_space<vmem>>, vector<1x32xf32>
    %54 = vector.broadcast %53 : vector<1x32xf32> to vector<8x32xf32>
    %55 = arith.addf %52, %54 : vector<8x32xf32>
    %56 = vector.extract_strided_slice %55 {offsets = [0, 0], sizes = [8, 16], strides = [1, 1]} : vector<8x32xf32> to vector<8x16xf32>
    %57 = vector.extract_strided_slice %55 {offsets = [0, 16], sizes = [8, 16], strides = [1, 1]} : vector<8x32xf32> to vector<8x16xf32>
    %cst_39 = arith.constant 2.000000e+01 : f32
    %58 = vector.broadcast %cst_39 : f32 to vector<8x16xf32>
    %59 = arith.cmpf ogt, %57, %58 : vector<8x16xf32>
    %cst_40 = arith.constant 2.000000e+01 : f32
    %60 = vector.broadcast %cst_40 : f32 to vector<8x16xf32>
    %61 = arith.minimumf %57, %60 : vector<8x16xf32>
    %62 = math.exp %61 : vector<8x16xf32>
    %63 = math.log1p %62 : vector<8x16xf32>
    %64 = arith.select %59, %57, %63 : vector<8x16xi1>, vector<8x16xf32>
    %cst_41 = arith.constant 5.000000e-01 : f32
    %65 = vector.broadcast %cst_41 : f32 to vector<8x16xf32>
    %66 = arith.mulf %65, %64 : vector<8x16xf32>
    %67 = math.exp %66 : vector<8x16xf32>
    %68 = arith.mulf %67, %31 : vector<8x16xf32>
    %69 = arith.addf %56, %68 : vector<8x16xf32>
    %c0_42 = arith.constant 0 : index
    %c0_43 = arith.constant 0 : index
    %70 = vector.load %arg15[%c0_42, %c0_43] : memref<8x64xf32, #tpu.memory_space<vmem>>, vector<8x8xf32>
    tpu.vector_store %arg15[%c0_42, %c0_43], %21 {strides = array<i32>} : memref<8x64xf32, #tpu.memory_space<vmem>>, vector<8x8xf32>,
    %c0_44 = arith.constant 0 : index
    %c8 = arith.constant 8 : index
    %71 = vector.load %arg15[%c0_44, %c8] : memref<8x64xf32, #tpu.memory_space<vmem>>, vector<8x8xf32>
    tpu.vector_store %arg15[%c0_44, %c8], %29 {strides = array<i32>} : memref<8x64xf32, #tpu.memory_space<vmem>>, vector<8x8xf32>,
    %c0_45 = arith.constant 0 : index
    %c16 = arith.constant 16 : index
    %72 = vector.load %arg15[%c0_45, %c16] : memref<8x64xf32, #tpu.memory_space<vmem>>, vector<8x16xf32>
    tpu.vector_store %arg15[%c0_45, %c16], %56 {strides = array<i32>} : memref<8x64xf32, #tpu.memory_space<vmem>>, vector<8x16xf32>,
    %c0_46 = arith.constant 0 : index
    %c32 = arith.constant 32 : index
    %73 = vector.load %arg15[%c0_46, %c32] : memref<8x64xf32, #tpu.memory_space<vmem>>, vector<8x16xf32>
    tpu.vector_store %arg15[%c0_46, %c32], %64 {strides = array<i32>} : memref<8x64xf32, #tpu.memory_space<vmem>>, vector<8x16xf32>,
    %c0_47 = arith.constant 0 : index
    %c48 = arith.constant 48 : index
    %74 = vector.load %arg15[%c0_47, %c48] : memref<8x64xf32, #tpu.memory_space<vmem>>, vector<8x16xf32>
    tpu.vector_store %arg15[%c0_47, %c48], %69 {strides = array<i32>} : memref<8x64xf32, #tpu.memory_space<vmem>>, vector<8x16xf32>,
    return
  }
  func.func @transform_0(%arg0: i32) -> (i32, i32) {
    %c0_i32 = arith.constant 0 : i32
    %c0_i32_0 = arith.constant 0 : i32
    return %arg0, %c0_i32 : i32, i32
  }
  func.func @transform_1(%arg0: i32) -> (i32, i32) {
    %c0_i32 = arith.constant 0 : i32
    %c0_i32_0 = arith.constant 0 : i32
    return %arg0, %c0_i32 : i32, i32
  }
  func.func @transform_2(%arg0: i32) -> (i32, i32) {
    %c0_i32 = arith.constant 0 : i32
    %c0_i32_0 = arith.constant 0 : i32
    %c0_i32_1 = arith.constant 0 : i32
    return %c0_i32, %c0_i32_0 : i32, i32
  }
  func.func @transform_3(%arg0: i32) -> (i32, i32) {
    %c0_i32 = arith.constant 0 : i32
    %c0_i32_0 = arith.constant 0 : i32
    %c0_i32_1 = arith.constant 0 : i32
    return %c0_i32, %c0_i32_0 : i32, i32
  }
  func.func @transform_4(%arg0: i32) -> (i32, i32) {
    %c0_i32 = arith.constant 0 : i32
    %c0_i32_0 = arith.constant 0 : i32
    %c0_i32_1 = arith.constant 0 : i32
    return %c0_i32, %c0_i32_0 : i32, i32
  }
  func.func @transform_5(%arg0: i32) -> (i32, i32) {
    %c0_i32 = arith.constant 0 : i32
    %c0_i32_0 = arith.constant 0 : i32
    %c0_i32_1 = arith.constant 0 : i32
    return %c0_i32, %c0_i32_0 : i32, i32
  }
  func.func @transform_6(%arg0: i32) -> (i32, i32) {
    %c0_i32 = arith.constant 0 : i32
    %c0_i32_0 = arith.constant 0 : i32
    %c0_i32_1 = arith.constant 0 : i32
    return %c0_i32, %c0_i32_0 : i32, i32
  }
  func.func @transform_7(%arg0: i32) -> (i32, i32) {
    %c0_i32 = arith.constant 0 : i32
    %c0_i32_0 = arith.constant 0 : i32
    %c0_i32_1 = arith.constant 0 : i32
    return %c0_i32, %c0_i32_0 : i32, i32
  }
  func.func @transform_8(%arg0: i32) -> (i32, i32) {
    %c0_i32 = arith.constant 0 : i32
    %c0_i32_0 = arith.constant 0 : i32
    %c0_i32_1 = arith.constant 0 : i32
    return %c0_i32, %c0_i32_0 : i32, i32
  }
  func.func @transform_9(%arg0: i32) -> (i32, i32) {
    %c0_i32 = arith.constant 0 : i32
    %c0_i32_0 = arith.constant 0 : i32
    %c0_i32_1 = arith.constant 0 : i32
    return %c0_i32, %c0_i32_0 : i32, i32
  }
  func.func @transform_10(%arg0: i32) -> (i32, i32) {
    %c0_i32 = arith.constant 0 : i32
    %c0_i32_0 = arith.constant 0 : i32
    %c0_i32_1 = arith.constant 0 : i32
    return %c0_i32, %c0_i32_0 : i32, i32
  }
  func.func @transform_11(%arg0: i32) -> (i32, i32) {
    %c0_i32 = arith.constant 0 : i32
    %c0_i32_0 = arith.constant 0 : i32
    %c0_i32_1 = arith.constant 0 : i32
    return %c0_i32, %c0_i32_0 : i32, i32
  }
  func.func @transform_12(%arg0: i32) -> (i32, i32) {
    %c0_i32 = arith.constant 0 : i32
    %c0_i32_0 = arith.constant 0 : i32
    %c0_i32_1 = arith.constant 0 : i32
    return %c0_i32, %c0_i32_0 : i32, i32
  }
  func.func @transform_13(%arg0: i32) -> (i32, i32) {
    %c0_i32 = arith.constant 0 : i32
    %c0_i32_0 = arith.constant 0 : i32
    %c0_i32_1 = arith.constant 0 : i32
    return %c0_i32, %c0_i32_0 : i32, i32
  }
  func.func @transform_14(%arg0: i32) -> (i32, i32) {
    %c0_i32 = arith.constant 0 : i32
    %c0_i32_0 = arith.constant 0 : i32
    return %arg0, %c0_i32 : i32, i32
  }
}

</mosaic_0001>

<llo_original>
// kernel: tpu_custom_call.1
$region0: #{tpu_custom_call.1}
  #allocation0 [shape = 'u32[]', space=smem, size = 0x4, offset = 0x4, fixed_abs, tag = 'smem constant byte address 0x4 - core index']
  #allocation1 [shape = 'u32[144,128]{1,0:T(1,128)}', space=vmem, size = 0x12000, scoped, tag = 'internal scratch']
  %s0 = inlined_call_operand.hbm [shape: f32[8,16], index: 0, kind: input, shape index: {}]
  %s1 = inlined_call_operand.hbm [shape: f32[8,24], index: 1, kind: input, shape index: {}]
  %s2 = inlined_call_operand.hbm [shape: f32[16,32], index: 2, kind: input, shape index: {}]
  %s3 = inlined_call_operand.vmem [shape: f32[1,32], index: 3, kind: input, shape index: {}]
  %s4 = inlined_call_operand.vmem [shape: f32[32,32], index: 4, kind: input, shape index: {}]
  %s5 = inlined_call_operand.vmem [shape: f32[1,32], index: 5, kind: input, shape index: {}]
  %s6 = inlined_call_operand.vmem [shape: f32[32,16], index: 6, kind: input, shape index: {}]
  %s7 = inlined_call_operand.hbm [shape: f32[1,16], index: 7, kind: input, shape index: {}]
  %s8 = inlined_call_operand.vmem [shape: f32[8,32], index: 8, kind: input, shape index: {}]
  %s9 = inlined_call_operand.vmem [shape: f32[1,32], index: 9, kind: input, shape index: {}]
  %s10 = inlined_call_operand.vmem [shape: f32[32,32], index: 10, kind: input, shape index: {}]
  %s11 = inlined_call_operand.vmem [shape: f32[1,32], index: 11, kind: input, shape index: {}]
  %s12 = inlined_call_operand.hbm [shape: f32[32,32], index: 12, kind: input, shape index: {}]
  %s13 = inlined_call_operand.vmem [shape: f32[1,32], index: 13, kind: input, shape index: {}]
  %s14 = inlined_call_operand.hbm [shape: f32[8,64], index: 14, kind: output, shape index: {}]
  %s15 = sld [smem:[#allocation0]]
  $region86: #{tpu_custom_call.1} parent=0
    _
  %s17 = ssub.s32 1, %s15
  %s18 = scalar_select 0, %s17, %s15
  $region1: #{tpu_custom_call.1} parent=0
    #allocation2 [shape = 'u8[4096]{0}', space=vmem, size = 0x1000, scoped, tag = 'input window, operand 0, single buffered']
    #allocation3 [shape = 's32[1]{0}', space=sflag, size = 0x4, scoped, tag = 'scoped memory for tpu_custom_call.1']
    #allocation4 [shape = 's32[1]{0}', space=sflag, size = 0x4, scoped, tag = 'scoped memory for tpu_custom_call.1']
    #allocation5 [shape = 'u8[4096]{0}', space=vmem, size = 0x1000, scoped, tag = 'input window, operand 1, single buffered']
    #allocation6 [shape = 's32[1]{0}', space=sflag, size = 0x4, scoped, tag = 'scoped memory for tpu_custom_call.1']
    #allocation7 [shape = 'u8[8192]{0}', space=vmem, size = 0x2000, scoped, tag = 'input window, operand 2, single buffered']
    #allocation8 [shape = 'u8[512]{0}', space=vmem, size = 0x400, scoped, tag = 'input window, operand 7, single buffered']
    #allocation9 [shape = 's32[1]{0}', space=sflag, size = 0x4, scoped, tag = 'scoped memory for tpu_custom_call.1']
    #allocation10 [shape = 'u8[16384]{0}', space=vmem, size = 0x4000, scoped, tag = 'input window, operand 12, single buffered']
    #allocation11 [shape = 'u8[4096]{0}', space=vmem, size = 0x1000, scoped, tag = 'output window, operand 0, single buffered']
    %19 = vsyncpa [#allocation3], 0
    %20 = vsyncpa [#allocation6], 0
    %21 = vsyncpa [#allocation9], 0
    %22 = vsyncpa [#allocation4], 0
    // Predicated region
    $region2: #{tpu_custom_call.1} parent=1 // pred_check
      _
    $region3: #{tpu_custom_call.1} parent=1 // pred_check_branch
      %24 = sbr.rel (0) target = $region5
    $region4: #{tpu_custom_call.1} parent=1 // pred_region
      %s26 = ssub.s32 128, 128
      %27 = vsyncadd [#allocation3], %s26
      %s29 = sshll.u32 [#allocation2], 4
      %s30 = int_to_ptr.vmem [resolvable:$true] %s29
      %32 = dma.hbm_to_vmem [thread:$0]  %s0, 128, %s30, [#allocation3]
    $region5: #{tpu_custom_call.1} parent=1 // pred_fallthru
      _
    // Predicated region
    $region6: #{tpu_custom_call.1} parent=1 // pred_check
      _
    $region7: #{tpu_custom_call.1} parent=1 // pred_check_branch
      %34 = sbr.rel (0) target = $region9
    $region8: #{tpu_custom_call.1} parent=1 // pred_region
      %s36 = ssub.s32 128, 128
      %37 = vsyncadd [#allocation6], %s36
      %s39 = sshll.u32 [#allocation5], 4
      %s40 = int_to_ptr.vmem [resolvable:$true] %s39
      %42 = dma.hbm_to_vmem [thread:$0]  %s1, 128, %s40, [#allocation6]
    $region9: #{tpu_custom_call.1} parent=1 // pred_fallthru
      _
    // Predicated region
    $region10: #{tpu_custom_call.1} parent=1 // pred_check
      _
    $region11: #{tpu_custom_call.1} parent=1 // pred_check_branch
      %44 = sbr.rel (0) target = $region13
    $region12: #{tpu_custom_call.1} parent=1 // pred_region
      %s46 = ssub.s32 256, 256
      %47 = vsyncadd [#allocation6], %s46
      %s48 = sshll.u32 [#allocation7], 4
      %s49 = int_to_ptr.vmem [resolvable:$true] %s48
      %54 = dma.hbm_to_vmem [thread:$0]  %s2, 256, %s49, [#allocation6], 128, 128, 8
    $region13: #{tpu_custom_call.1} parent=1 // pred_fallthru
      _
    // Predicated region
    $region14: #{tpu_custom_call.1} parent=1 // pred_check
      _
    $region15: #{tpu_custom_call.1} parent=1 // pred_check_branch
      %56 = sbr.rel (0) target = $region17
    $region16: #{tpu_custom_call.1} parent=1 // pred_region
      _
    $region17: #{tpu_custom_call.1} parent=1 // pred_fallthru
      _
    // Predicated region
    $region18: #{tpu_custom_call.1} parent=1 // pred_check
      _
    $region19: #{tpu_custom_call.1} parent=1 // pred_check_branch
      %58 = sbr.rel (0) target = $region21
    $region20: #{tpu_custom_call.1} parent=1 // pred_region
      _
    $region21: #{tpu_custom_call.1} parent=1 // pred_fallthru
      _
    // Predicated region
    $region22: #{tpu_custom_call.1} parent=1 // pred_check
      _
    $region23: #{tpu_custom_call.1} parent=1 // pred_check_branch
      %60 = sbr.rel (0) target = $region25
    $region24: #{tpu_custom_call.1} parent=1 // pred_region
      _
    $region25: #{tpu_custom_call.1} parent=1 // pred_fallthru
      _
    // Predicated region
    $region26: #{tpu_custom_call.1} parent=1 // pred_check
      _
    $region27: #{tpu_custom_call.1} parent=1 // pred_check_branch
      %62 = sbr.rel (0) target = $region29
    $region28: #{tpu_custom_call.1} parent=1 // pred_region
      _
    $region29: #{tpu_custom_call.1} parent=1 // pred_fallthru
      _
    // Predicated region
    $region30: #{tpu_custom_call.1} parent=1 // pred_check
      _
    $region31: #{tpu_custom_call.1} parent=1 // pred_check_branch
      %64 = sbr.rel (0) target = $region33
    $region32: #{tpu_custom_call.1} parent=1 // pred_region
      %s66 = ssub.s32 16, 16
      %67 = vsyncadd [#allocation9], %s66
      %s69 = sshll.u32 [#allocation8], 4
      %s70 = int_to_ptr.vmem [resolvable:$true] %s69
      %72 = dma.hbm_to_vmem [thread:$0]  %s7, 16, %s70, [#allocation9]
    $region33: #{tpu_custom_call.1} parent=1 // pred_fallthru
      _
    // Predicated region
    $region34: #{tpu_custom_call.1} parent=1 // pred_check
      _
    $region35: #{tpu_custom_call.1} parent=1 // pred_check_branch
      %74 = sbr.rel (0) target = $region37
    $region36: #{tpu_custom_call.1} parent=1 // pred_region
      _
    $region37: #{tpu_custom_call.1} parent=1 // pred_fallthru
      _
    // Predicated region
    $region38: #{tpu_custom_call.1} parent=1 // pred_check
      _
    $region39: #{tpu_custom_call.1} parent=1 // pred_check_branch
      %76 = sbr.rel (0) target = $region41
    $region40: #{tpu_custom_call.1} parent=1 // pred_region
      _
    $region41: #{tpu_custom_call.1} parent=1 // pred_fallthru
      _
    // Predicated region
    $region42: #{tpu_custom_call.1} parent=1 // pred_check
      _
    $region43: #{tpu_custom_call.1} parent=1 // pred_check_branch
      %78 = sbr.rel (0) target = $region45
    $region44: #{tpu_custom_call.1} parent=1 // pred_region
      _
    $region45: #{tpu_custom_call.1} parent=1 // pred_fallthru
      _
    // Predicated region
    $region46: #{tpu_custom_call.1} parent=1 // pred_check
      _
    $region47: #{tpu_custom_call.1} parent=1 // pred_check_branch
      %80 = sbr.rel (0) target = $region49
    $region48: #{tpu_custom_call.1} parent=1 // pred_region
      _
    $region49: #{tpu_custom_call.1} parent=1 // pred_fallthru
      _
    // Predicated region
    $region50: #{tpu_custom_call.1} parent=1 // pred_check
      _
    $region51: #{tpu_custom_call.1} parent=1 // pred_check_branch
      %82 = sbr.rel (0) target = $region53
    $region52: #{tpu_custom_call.1} parent=1 // pred_region
      %s84 = ssub.s32 512, 512
      %85 = vsyncadd [#allocation9], %s84
      %s86 = sshll.u32 [#allocation10], 4
      %s87 = int_to_ptr.vmem [resolvable:$true] %s86
      %92 = dma.hbm_to_vmem [thread:$0]  %s12, 512, %s87, [#allocation9], 128, 128, 8
    $region53: #{tpu_custom_call.1} parent=1 // pred_fallthru
      _
    // Predicated region
    $region54: #{tpu_custom_call.1} parent=1 // pred_check
      _
    $region55: #{tpu_custom_call.1} parent=1 // pred_check_branch
      %94 = sbr.rel (0) target = $region57
    $region56: #{tpu_custom_call.1} parent=1 // pred_region
      _
    $region57: #{tpu_custom_call.1} parent=1 // pred_fallthru
      _
    // Predicated region
    $region58: #{tpu_custom_call.1} parent=1 // pred_check
      _
    $region59: #{tpu_custom_call.1} parent=1 // pred_check_branch
      %96 = sbr.rel (0) target = $region61
    $region60: #{tpu_custom_call.1} parent=1 // pred_region
      %97 = dma.done [#allocation3], 128
    $region61: #{tpu_custom_call.1} parent=1 // pred_fallthru
      _
    // Predicated region
    $region62: #{tpu_custom_call.1} parent=1 // pred_check
      _
    $region63: #{tpu_custom_call.1} parent=1 // pred_check_branch
      %99 = sbr.rel (0) target = $region65
    $region64: #{tpu_custom_call.1} parent=1 // pred_region
      %100 = dma.done [#allocation6], 128
    $region65: #{tpu_custom_call.1} parent=1 // pred_fallthru
      _
    // Predicated region
    $region66: #{tpu_custom_call.1} parent=1 // pred_check
      _
    $region67: #{tpu_custom_call.1} parent=1 // pred_check_branch
      %102 = sbr.rel (0) target = $region69
    $region68: #{tpu_custom_call.1} parent=1 // pred_region
      %103 = dma.done [#allocation6], 256
    $region69: #{tpu_custom_call.1} parent=1 // pred_fallthru
      _
    // Predicated region
    $region70: #{tpu_custom_call.1} parent=1 // pred_check
      _
    $region71: #{tpu_custom_call.1} parent=1 // pred_check_branch
      %105 = sbr.rel (0) target = $region73
    $region72: #{tpu_custom_call.1} parent=1 // pred_region
      %106 = dma.done [#allocation9], 16
    $region73: #{tpu_custom_call.1} parent=1 // pred_fallthru
      _
    // Predicated region
    $region74: #{tpu_custom_call.1} parent=1 // pred_check
      _
    $region75: #{tpu_custom_call.1} parent=1 // pred_check_branch
      %108 = sbr.rel (0) target = $region77
    $region76: #{tpu_custom_call.1} parent=1 // pred_region
      %109 = dma.done [#allocation9], 512
    $region77: #{tpu_custom_call.1} parent=1 // pred_fallthru
      _
    %v110 = vld [vmem:[#allocation2] sm:$0xff]
    %v111 = vld [vmem:[#allocation5] sm:$0xff]
    %v112 = vld [vmem:[#allocation7] sm:$0xff]
    %v113 = vld [vmem:[#allocation7 + $0x8] sm:$0xff]
    %v114 = vld [vmem:[%s3] sm:$0x1]
    %v116 = vlaneseq
    %v117 = vshrl.u32 %v116, 7
    %v118 = vsub.s32 0, %v117
    %v119 = vrot.slane %v114, %v118
    %vm121 = vcmask 130048
    %v123 = vsel %vm121, %v110, 0
    %125 = vmatprep.subr.mxu0 0.0
    %126 = vmatpush1.msra.mxu0 %v112
    %127 = vmatprep.subr.mxu0 0.0
    %128 = vmatpush1.msra.mxu0 %v113
    %129 = vmatprep.subr.mxu0 0.0
    %130 = vmatpush1.msra.mxu0 0.0
    %131 = vmatprep.subr.mxu0 0.0
    %132 = vmatpush1.msra.mxu0 0.0
    %133 = vmatprep.subr.mxu0 0.0
    %134 = vmatpush1.msra.mxu0 0.0
    %135 = vmatprep.subr.mxu0 0.0
    %136 = vmatpush1.msra.mxu0 0.0
    %137 = vmatprep.subr.mxu0 0.0
    %138 = vmatpush1.msra.mxu0 0.0
    %139 = vmatprep.subr.mxu0 0.0
    %140 = vmatpush1.msra.mxu0 0.0
    %141 = vmatprep.subr.mxu0 0.0
    %142 = vmatpush1.msra.mxu0 0.0
    %143 = vmatprep.subr.mxu0 0.0
    %144 = vmatpush1.msra.mxu0 0.0
    %145 = vmatprep.subr.mxu0 0.0
    %146 = vmatpush1.msra.mxu0 0.0
    %147 = vmatprep.subr.mxu0 0.0
    %148 = vmatpush1.msra.mxu0 0.0
    %149 = vmatprep.subr.mxu0 0.0
    %150 = vmatpush1.msra.mxu0 0.0
    %151 = vmatprep.subr.mxu0 0.0
    %152 = vmatpush1.msra.mxu0 0.0
    %153 = vmatprep.subr.mxu0 0.0
    %154 = vmatpush1.msra.mxu0 0.0
    %155 = vmatprep.subr.mxu0 0.0
    %156 = vmatpush1.msra.mxu0 0.0
    %157 = vmatprep.subr.mxu0 0.0
    %158 = vmatpush1.msra.mxu0 0.0
    %159 = vmatprep.subr.mxu0 0.0
    %160 = vmatpush1.msra.mxu0 0.0
    %161 = vmatprep.subr.mxu0 0.0
    %162 = vmatpush1.msra.mxu0 0.0
    %163 = vmatprep.subr.mxu0 0.0
    %164 = vmatpush1.msra.mxu0 0.0
    %165 = vmatprep.subr.mxu0 0.0
    %166 = vmatpush1.msra.mxu0 0.0
    %167 = vmatprep.subr.mxu0 0.0
    %168 = vmatpush1.msra.mxu0 0.0
    %169 = vmatprep.subr.mxu0 0.0
    %170 = vmatpush1.msra.mxu0 0.0
    %171 = vmatprep.subr.mxu0 0.0
    %172 = vmatpush1.msra.mxu0 0.0
    %173 = vmatprep.subr.mxu0 0.0
    %174 = vmatpush1.msra.mxu0 0.0
    %175 = vmatprep.subr.mxu0 0.0
    %176 = vmatpush1.msra.mxu0 0.0
    %177 = vmatprep.subr.mxu0 0.0
    %178 = vmatpush1.msra.mxu0 0.0
    %179 = vmatprep.subr.mxu0 0.0
    %180 = vmatpush1.msra.mxu0 0.0
    %181 = vmatprep.subr.mxu0 0.0
    %182 = vmatpush1.msra.mxu0 0.0
    %183 = vmatprep.subr.mxu0 0.0
    %184 = vmatpush1.msra.mxu0 0.0
    %185 = vmatprep.subr.mxu0 0.0
    %186 = vmatpush1.msra.mxu0 0.0
    %187 = vmatprep.subr.mxu0 0.0
    %188 = vmatpush1.msra.mxu0 0.0
    %189 = vmatprep.mubr.f32.mxu0 0.0
    %190 = vmatmul.mubr.f32.gmra.mrb[0].mxu0 %v123
    %v191 = vpop.f32.mrb[0].mxu0
    %v192 = vadd.f32 %v119, %v191
    %v193 = vpop.f32.mrb[0].mxu0
    %194 = vdwg.mxu0
    %v195 = vmax.f32 %v192, 0.0
    %v196 = vld [vmem:[%s4] sm:$0xff]
    %v197 = vld [vmem:[%s4 + $0x8] sm:$0xff]
    %v198 = vld [vmem:[%s4 + $0x10] sm:$0xff]
    %v199 = vld [vmem:[%s4 + $0x18] sm:$0xff]
    %v200 = vld [vmem:[%s5] sm:$0x1]
    %v202 = vlaneseq
    %v203 = vshrl.u32 %v202, 7
    %v204 = vsub.s32 0, %v203
    %v205 = vrot.slane %v200, %v204
    %vm207 = vcmask 261120
    %v209 = vsel %vm207, %v195, 0
    %211 = vmatprep.subr.mxu0 0.0
    %212 = vmatpush1.msra.mxu0 %v196
    %213 = vmatprep.subr.mxu0 0.0
    %214 = vmatpush1.msra.mxu0 %v197
    %215 = vmatprep.subr.mxu0 0.0
    %216 = vmatpush1.msra.mxu0 %v198
    %217 = vmatprep.subr.mxu0 0.0
    %218 = vmatpush1.msra.mxu0 %v199
    %219 = vmatprep.subr.mxu0 0.0
    %220 = vmatpush1.msra.mxu0 0.0
    %221 = vmatprep.subr.mxu0 0.0
    %222 = vmatpush1.msra.mxu0 0.0
    %223 = vmatprep.subr.mxu0 0.0
    %224 = vmatpush1.msra.mxu0 0.0
    %225 = vmatprep.subr.mxu0 0.0
    %226 = vmatpush1.msra.mxu0 0.0
    %227 = vmatprep.subr.mxu0 0.0
    %228 = vmatpush1.msra.mxu0 0.0
    %229 = vmatprep.subr.mxu0 0.0
    %230 = vmatpush1.msra.mxu0 0.0
    %231 = vmatprep.subr.mxu0 0.0
    %232 = vmatpush1.msra.mxu0 0.0
    %233 = vmatprep.subr.mxu0 0.0
    %234 = vmatpush1.msra.mxu0 0.0
    %235 = vmatprep.subr.mxu0 0.0
    %236 = vmatpush1.msra.mxu0 0.0
    %237 = vmatprep.subr.mxu0 0.0
    %238 = vmatpush1.msra.mxu0 0.0
    %239 = vmatprep.subr.mxu0 0.0
    %240 = vmatpush1.msra.mxu0 0.0
    %241 = vmatprep.subr.mxu0 0.0
    %242 = vmatpush1.msra.mxu0 0.0
    %243 = vmatprep.subr.mxu0 0.0
    %244 = vmatpush1.msra.mxu0 0.0
    %245 = vmatprep.subr.mxu0 0.0
    %246 = vmatpush1.msra.mxu0 0.0
    %247 = vmatprep.subr.mxu0 0.0
    %248 = vmatpush1.msra.mxu0 0.0
    %249 = vmatprep.subr.mxu0 0.0
    %250 = vmatpush1.msra.mxu0 0.0
    %251 = vmatprep.subr.mxu0 0.0
    %252 = vmatpush1.msra.mxu0 0.0
    %253 = vmatprep.subr.mxu0 0.0
    %254 = vmatpush1.msra.mxu0 0.0
    %255 = vmatprep.subr.mxu0 0.0
    %256 = vmatpush1.msra.mxu0 0.0
    %257 = vmatprep.subr.mxu0 0.0
    %258 = vmatpush1.msra.mxu0 0.0
    %259 = vmatprep.subr.mxu0 0.0
    %260 = vmatpush1.msra.mxu0 0.0
    %261 = vmatprep.subr.mxu0 0.0
    %262 = vmatpush1.msra.mxu0 0.0
    %263 = vmatprep.subr.mxu0 0.0
    %264 = vmatpush1.msra.mxu0 0.0
    %265 = vmatprep.subr.mxu0 0.0
    %266 = vmatpush1.msra.mxu0 0.0
    %267 = vmatprep.subr.mxu0 0.0
    %268 = vmatpush1.msra.mxu0 0.0
    %269 = vmatprep.subr.mxu0 0.0
    %270 = vmatpush1.msra.mxu0 0.0
    %271 = vmatprep.subr.mxu0 0.0
    %272 = vmatpush1.msra.mxu0 0.0
    %273 = vmatprep.subr.mxu0 0.0
    %274 = vmatpush1.msra.mxu0 0.0
    %275 = vmatprep.mubr.f32.mxu0 0.0
    %276 = vmatmul.mubr.f32.gmra.mrb[0].mxu0 %v209
    %v277 = vpop.f32.mrb[0].mxu0
    %v278 = vadd.f32 %v205, %v277
    %v279 = vpop.f32.mrb[0].mxu0
    %280 = vdwg.mxu0
    %v281 = vmax.f32 %v278, 0.0
    %v282 = vld [vmem:[%s6] sm:$0xff]
    %v283 = vld [vmem:[%s6 + $0x8] sm:$0xff]
    %v284 = vld [vmem:[%s6 + $0x10] sm:$0xff]
    %v285 = vld [vmem:[%s6 + $0x18] sm:$0xff]
    %v286 = vld [vmem:[#allocation8] sm:$0x1]
    %v288 = vlaneseq
    %v289 = vshrl.u32 %v288, 7
    %v290 = vsub.s32 0, %v289
    %v291 = vrot.slane %v286, %v290
    %v294 = vsel %vm207, %v281, 0
    %296 = vmatprep.subr.mxu0 0.0
    %297 = vmatpush1.msra.mxu0 %v282
    %298 = vmatprep.subr.mxu0 0.0
    %299 = vmatpush1.msra.mxu0 %v283
    %300 = vmatprep.subr.mxu0 0.0
    %301 = vmatpush1.msra.mxu0 %v284
    %302 = vmatprep.subr.mxu0 0.0
    %303 = vmatpush1.msra.mxu0 %v285
    %304 = vmatprep.subr.mxu0 0.0
    %305 = vmatpush1.msra.mxu0 0.0
    %306 = vmatprep.subr.mxu0 0.0
    %307 = vmatpush1.msra.mxu0 0.0
    %308 = vmatprep.subr.mxu0 0.0
    %309 = vmatpush1.msra.mxu0 0.0
    %310 = vmatprep.subr.mxu0 0.0
    %311 = vmatpush1.msra.mxu0 0.0
    %312 = vmatprep.subr.mxu0 0.0
    %313 = vmatpush1.msra.mxu0 0.0
    %314 = vmatprep.subr.mxu0 0.0
    %315 = vmatpush1.msra.mxu0 0.0
    %316 = vmatprep.subr.mxu0 0.0
    %317 = vmatpush1.msra.mxu0 0.0
    %318 = vmatprep.subr.mxu0 0.0
    %319 = vmatpush1.msra.mxu0 0.0
    %320 = vmatprep.subr.mxu0 0.0
    %321 = vmatpush1.msra.mxu0 0.0
    %322 = vmatprep.subr.mxu0 0.0
    %323 = vmatpush1.msra.mxu0 0.0
    %324 = vmatprep.subr.mxu0 0.0
    %325 = vmatpush1.msra.mxu0 0.0
    %326 = vmatprep.subr.mxu0 0.0
    %327 = vmatpush1.msra.mxu0 0.0
    %328 = vmatprep.subr.mxu0 0.0
    %329 = vmatpush1.msra.mxu0 0.0
    %330 = vmatprep.subr.mxu0 0.0
    %331 = vmatpush1.msra.mxu0 0.0
    %332 = vmatprep.subr.mxu0 0.0
    %333 = vmatpush1.msra.mxu0 0.0
    %334 = vmatprep.subr.mxu0 0.0
    %335 = vmatpush1.msra.mxu0 0.0
    %336 = vmatprep.subr.mxu0 0.0
    %337 = vmatpush1.msra.mxu0 0.0
    %338 = vmatprep.subr.mxu0 0.0
    %339 = vmatpush1.msra.mxu0 0.0
    %340 = vmatprep.subr.mxu0 0.0
    %341 = vmatpush1.msra.mxu0 0.0
    %342 = vmatprep.subr.mxu0 0.0
    %343 = vmatpush1.msra.mxu0 0.0
    %344 = vmatprep.subr.mxu0 0.0
    %345 = vmatpush1.msra.mxu0 0.0
    %346 = vmatprep.subr.mxu0 0.0
    %347 = vmatpush1.msra.mxu0 0.0
    %348 = vmatprep.subr.mxu0 0.0
    %349 = vmatpush1.msra.mxu0 0.0
    %350 = vmatprep.subr.mxu0 0.0
    %351 = vmatpush1.msra.mxu0 0.0
    %352 = vmatprep.subr.mxu0 0.0
    %353 = vmatpush1.msra.mxu0 0.0
    %354 = vmatprep.subr.mxu0 0.0
    %355 = vmatpush1.msra.mxu0 0.0
    %356 = vmatprep.subr.mxu0 0.0
    %357 = vmatpush1.msra.mxu0 0.0
    %358 = vmatprep.subr.mxu0 0.0
    %359 = vmatpush1.msra.mxu0 0.0
    %360 = vmatprep.mubr.f32.mxu0 0.0
    %361 = vmatmul.mubr.f32.gmra.mrb[0].mxu0 %v294
    %v362 = vpop.f32.mrb[0].mxu0
    %v363 = vadd.f32 %v291, %v362
    %v364 = vpop.f32.mrb[0].mxu0
    %365 = vdwg.mxu0
    %vm366 = vcmp.gt.f32.partialorder %v363, 20.0
    %v367 = vmin.f32 %v363, 20.0
    %v368 = vmul.f32 %v367, 1.442695
    %v369 = vpow.pop %v368
    %v370 = vadd.f32 %v369, 1.0
    %v371 = vlog2.pop %v370
    %v372 = vmul.f32 %v371, 0.6931472
    %v373 = vmul.f32 -0.5, %v369
    %v374 = vadd.f32 %v373, 1.0
    %v375 = vmul.f32 %v374, %v369
    %v376 = vand.u32 2147483647, %v369
    %vm377 = vcmp.lt.f32.partialorder %v376, 0.0004427343
    %v378 = vsel %vm377, %v375, %v372
    %v379 = vsel %vm366, %v363, %v378
    %v380 = vmul.f32 %v379, 0.5
    %v381 = vmul.f32 %v380, 1.442695
    %v382 = vpow.pop %v381
    %384 = vrot.lane.b32.xlu0 %v111, 8
    %v385 = vpop.permute.xlu0 %384
    %v387 = vmul.f32 %v382, %v385
    %389 = vrot.lane.b32.xlu0 %v387, 120
    %v390 = vpop.permute.xlu0 %389
    %v392 = vadd.f32 %v363, %v390
    %v393 = vld [vmem:[%s8] sm:$0xff]
    %v394 = vld [vmem:[%s9] sm:$0x1]
    %v396 = vlaneseq
    %v397 = vshrl.u32 %v396, 7
    %v398 = vsub.s32 0, %v397
    %v399 = vrot.slane %v394, %v398
    %vm401 = vcmask 64512
    %v403 = vsel %vm401, %v392, 0
    %405 = vmatprep.subr.mxu0 0.0
    %406 = vmatpush1.msra.mxu0 %v393
    %407 = vmatprep.subr.mxu0 0.0
    %408 = vmatpush1.msra.mxu0 0.0
    %409 = vmatprep.subr.mxu0 0.0
    %410 = vmatpush1.msra.mxu0 0.0
    %411 = vmatprep.subr.mxu0 0.0
    %412 = vmatpush1.msra.mxu0 0.0
    %413 = vmatprep.subr.mxu0 0.0
    %414 = vmatpush1.msra.mxu0 0.0
    %415 = vmatprep.subr.mxu0 0.0
    %416 = vmatpush1.msra.mxu0 0.0
    %417 = vmatprep.subr.mxu0 0.0
    %418 = vmatpush1.msra.mxu0 0.0
    %419 = vmatprep.subr.mxu0 0.0
    %420 = vmatpush1.msra.mxu0 0.0
    %421 = vmatprep.subr.mxu0 0.0
    %422 = vmatpush1.msra.mxu0 0.0
    %423 = vmatprep.subr.mxu0 0.0
    %424 = vmatpush1.msra.mxu0 0.0
    %425 = vmatprep.subr.mxu0 0.0
    %426 = vmatpush1.msra.mxu0 0.0
    %427 = vmatprep.subr.mxu0 0.0
    %428 = vmatpush1.msra.mxu0 0.0
    %429 = vmatprep.subr.mxu0 0.0
    %430 = vmatpush1.msra.mxu0 0.0
    %431 = vmatprep.subr.mxu0 0.0
    %432 = vmatpush1.msra.mxu0 0.0
    %433 = vmatprep.subr.mxu0 0.0
    %434 = vmatpush1.msra.mxu0 0.0
    %435 = vmatprep.subr.mxu0 0.0
    %436 = vmatpush1.msra.mxu0 0.0
    %437 = vmatprep.subr.mxu0 0.0
    %438 = vmatpush1.msra.mxu0 0.0
    %439 = vmatprep.subr.mxu0 0.0
    %440 = vmatpush1.msra.mxu0 0.0
    %441 = vmatprep.subr.mxu0 0.0
    %442 = vmatpush1.msra.mxu0 0.0
    %443 = vmatprep.subr.mxu0 0.0
    %444 = vmatpush1.msra.mxu0 0.0
    %445 = vmatprep.subr.mxu0 0.0
    %446 = vmatpush1.msra.mxu0 0.0
    %447 = vmatprep.subr.mxu0 0.0
    %448 = vmatpush1.msra.mxu0 0.0
    %449 = vmatprep.subr.mxu0 0.0
    %450 = vmatpush1.msra.mxu0 0.0
    %451 = vmatprep.subr.mxu0 0.0
    %452 = vmatpush1.msra.mxu0 0.0
    %453 = vmatprep.subr.mxu0 0.0
    %454 = vmatpush1.msra.mxu0 0.0
    %455 = vmatprep.subr.mxu0 0.0
    %456 = vmatpush1.msra.mxu0 0.0
    %457 = vmatprep.subr.mxu0 0.0
    %458 = vmatpush1.msra.mxu0 0.0
    %459 = vmatprep.subr.mxu0 0.0
    %460 = vmatpush1.msra.mxu0 0.0
    %461 = vmatprep.subr.mxu0 0.0
    %462 = vmatpush1.msra.mxu0 0.0
    %463 = vmatprep.subr.mxu0 0.0
    %464 = vmatpush1.msra.mxu0 0.0
    %465 = vmatprep.subr.mxu0 0.0
    %466 = vmatpush1.msra.mxu0 0.0
    %467 = vmatprep.subr.mxu0 0.0
    %468 = vmatpush1.msra.mxu0 0.0
    %469 = vmatprep.mubr.f32.mxu0 0.0
    %470 = vmatmul.mubr.f32.gmra.mrb[0].mxu0 %v403
    %v471 = vpop.f32.mrb[0].mxu0
    %v472 = vadd.f32 %v399, %v471
    %v473 = vpop.f32.mrb[0].mxu0
    %474 = vdwg.mxu0
    %v475 = vmax.f32 %v472, 0.0
    %v476 = vld [vmem:[%s10] sm:$0xff]
    %v477 = vld [vmem:[%s10 + $0x8] sm:$0xff]
    %v478 = vld [vmem:[%s10 + $0x10] sm:$0xff]
    %v479 = vld [vmem:[%s10 + $0x18] sm:$0xff]
    %v480 = vld [vmem:[%s11] sm:$0x1]
    %v482 = vlaneseq
    %v483 = vshrl.u32 %v482, 7
    %v484 = vsub.s32 0, %v483
    %v485 = vrot.slane %v480, %v484
    %v488 = vsel %vm207, %v475, 0
    %490 = vmatprep.subr.mxu0 0.0
    %491 = vmatpush1.msra.mxu0 %v476
    %492 = vmatprep.subr.mxu0 0.0
    %493 = vmatpush1.msra.mxu0 %v477
    %494 = vmatprep.subr.mxu0 0.0
    %495 = vmatpush1.msra.mxu0 %v478
    %496 = vmatprep.subr.mxu0 0.0
    %497 = vmatpush1.msra.mxu0 %v479
    %498 = vmatprep.subr.mxu0 0.0
    %499 = vmatpush1.msra.mxu0 0.0
    %500 = vmatprep.subr.mxu0 0.0
    %501 = vmatpush1.msra.mxu0 0.0
    %502 = vmatprep.subr.mxu0 0.0
    %503 = vmatpush1.msra.mxu0 0.0
    %504 = vmatprep.subr.mxu0 0.0
    %505 = vmatpush1.msra.mxu0 0.0
    %506 = vmatprep.subr.mxu0 0.0
    %507 = vmatpush1.msra.mxu0 0.0
    %508 = vmatprep.subr.mxu0 0.0
    %509 = vmatpush1.msra.mxu0 0.0
    %510 = vmatprep.subr.mxu0 0.0
    %511 = vmatpush1.msra.mxu0 0.0
    %512 = vmatprep.subr.mxu0 0.0
    %513 = vmatpush1.msra.mxu0 0.0
    %514 = vmatprep.subr.mxu0 0.0
    %515 = vmatpush1.msra.mxu0 0.0
    %516 = vmatprep.subr.mxu0 0.0
    %517 = vmatpush1.msra.mxu0 0.0
    %518 = vmatprep.subr.mxu0 0.0
    %519 = vmatpush1.msra.mxu0 0.0
    %520 = vmatprep.subr.mxu0 0.0
    %521 = vmatpush1.msra.mxu0 0.0
    %522 = vmatprep.subr.mxu0 0.0
    %523 = vmatpush1.msra.mxu0 0.0
    %524 = vmatprep.subr.mxu0 0.0
    %525 = vmatpush1.msra.mxu0 0.0
    %526 = vmatprep.subr.mxu0 0.0
    %527 = vmatpush1.msra.mxu0 0.0
    %528 = vmatprep.subr.mxu0 0.0
    %529 = vmatpush1.msra.mxu0 0.0
    %530 = vmatprep.subr.mxu0 0.0
    %531 = vmatpush1.msra.mxu0 0.0
    %532 = vmatprep.subr.mxu0 0.0
    %533 = vmatpush1.msra.mxu0 0.0
    %534 = vmatprep.subr.mxu0 0.0
    %535 = vmatpush1.msra.mxu0 0.0
    %536 = vmatprep.subr.mxu0 0.0
    %537 = vmatpush1.msra.mxu0 0.0
    %538 = vmatprep.subr.mxu0 0.0
    %539 = vmatpush1.msra.mxu0 0.0
    %540 = vmatprep.subr.mxu0 0.0
    %541 = vmatpush1.msra.mxu0 0.0
    %542 = vmatprep.subr.mxu0 0.0
    %543 = vmatpush1.msra.mxu0 0.0
    %544 = vmatprep.subr.mxu0 0.0
    %545 = vmatpush1.msra.mxu0 0.0
    %546 = vmatprep.subr.mxu0 0.0
    %547 = vmatpush1.msra.mxu0 0.0
    %548 = vmatprep.subr.mxu0 0.0
    %549 = vmatpush1.msra.mxu0 0.0
    %550 = vmatprep.subr.mxu0 0.0
    %551 = vmatpush1.msra.mxu0 0.0
    %552 = vmatprep.subr.mxu0 0.0
    %553 = vmatpush1.msra.mxu0 0.0
    %554 = vmatprep.mubr.f32.mxu0 0.0
    %555 = vmatmul.mubr.f32.gmra.mrb[0].mxu0 %v488
    %v556 = vpop.f32.mrb[0].mxu0
    %v557 = vadd.f32 %v485, %v556
    %v558 = vpop.f32.mrb[0].mxu0
    %559 = vdwg.mxu0
    %v560 = vmax.f32 %v557, 0.0
    %v561 = vld [vmem:[#allocation10] sm:$0xff]
    %v562 = vld [vmem:[#allocation10 + $0x8] sm:$0xff]
    %v563 = vld [vmem:[#allocation10 + $0x10] sm:$0xff]
    %v564 = vld [vmem:[#allocation10 + $0x18] sm:$0xff]
    %v565 = vld [vmem:[%s13] sm:$0x1]
    %v567 = vlaneseq
    %v568 = vshrl.u32 %v567, 7
    %v569 = vsub.s32 0, %v568
    %v570 = vrot.slane %v565, %v569
    %v573 = vsel %vm207, %v560, 0
    %575 = vmatprep.subr.mxu0 0.0
    %576 = vmatpush1.msra.mxu0 %v561
    %577 = vmatprep.subr.mxu0 0.0
    %578 = vmatpush1.msra.mxu0 %v562
    %579 = vmatprep.subr.mxu0 0.0
    %580 = vmatpush1.msra.mxu0 %v563
    %581 = vmatprep.subr.mxu0 0.0
    %582 = vmatpush1.msra.mxu0 %v564
    %583 = vmatprep.subr.mxu0 0.0
    %584 = vmatpush1.msra.mxu0 0.0
    %585 = vmatprep.subr.mxu0 0.0
    %586 = vmatpush1.msra.mxu0 0.0
    %587 = vmatprep.subr.mxu0 0.0
    %588 = vmatpush1.msra.mxu0 0.0
    %589 = vmatprep.subr.mxu0 0.0
    %590 = vmatpush1.msra.mxu0 0.0
    %591 = vmatprep.subr.mxu0 0.0
    %592 = vmatpush1.msra.mxu0 0.0
    %593 = vmatprep.subr.mxu0 0.0
    %594 = vmatpush1.msra.mxu0 0.0
    %595 = vmatprep.subr.mxu0 0.0
    %596 = vmatpush1.msra.mxu0 0.0
    %597 = vmatprep.subr.mxu0 0.0
    %598 = vmatpush1.msra.mxu0 0.0
    %599 = vmatprep.subr.mxu0 0.0
    %600 = vmatpush1.msra.mxu0 0.0
    %601 = vmatprep.subr.mxu0 0.0
    %602 = vmatpush1.msra.mxu0 0.0
    %603 = vmatprep.subr.mxu0 0.0
    %604 = vmatpush1.msra.mxu0 0.0
    %605 = vmatprep.subr.mxu0 0.0
    %606 = vmatpush1.msra.mxu0 0.0
    %607 = vmatprep.subr.mxu0 0.0
    %608 = vmatpush1.msra.mxu0 0.0
    %609 = vmatprep.subr.mxu0 0.0
    %610 = vmatpush1.msra.mxu0 0.0
    %611 = vmatprep.subr.mxu0 0.0
    %612 = vmatpush1.msra.mxu0 0.0
    %613 = vmatprep.subr.mxu0 0.0
    %614 = vmatpush1.msra.mxu0 0.0
    %615 = vmatprep.subr.mxu0 0.0
    %616 = vmatpush1.msra.mxu0 0.0
    %617 = vmatprep.subr.mxu0 0.0
    %618 = vmatpush1.msra.mxu0 0.0
    %619 = vmatprep.subr.mxu0 0.0
    %620 = vmatpush1.msra.mxu0 0.0
    %621 = vmatprep.subr.mxu0 0.0
    %622 = vmatpush1.msra.mxu0 0.0
    %623 = vmatprep.subr.mxu0 0.0
    %624 = vmatpush1.msra.mxu0 0.0
    %625 = vmatprep.subr.mxu0 0.0
    %626 = vmatpush1.msra.mxu0 0.0
    %627 = vmatprep.subr.mxu0 0.0
    %628 = vmatpush1.msra.mxu0 0.0
    %629 = vmatprep.subr.mxu0 0.0
    %630 = vmatpush1.msra.mxu0 0.0
    %631 = vmatprep.subr.mxu0 0.0
    %632 = vmatpush1.msra.mxu0 0.0
    %633 = vmatprep.subr.mxu0 0.0
    %634 = vmatpush1.msra.mxu0 0.0
    %635 = vmatprep.subr.mxu0 0.0
    %636 = vmatpush1.msra.mxu0 0.0
    %637 = vmatprep.subr.mxu0 0.0
    %638 = vmatpush1.msra.mxu0 0.0
    %639 = vmatprep.mubr.f32.mxu0 0.0
    %640 = vmatmul.mubr.f32.gmra.mrb[0].mxu0 %v573
    %v641 = vpop.f32.mrb[0].mxu0
    %v642 = vadd.f32 %v570, %v641
    %v643 = vpop.f32.mrb[0].mxu0
    %644 = vdwg.mxu0
    %vm645 = vcmp.gt.f32.partialorder %v642, 20.0
    %v646 = vmin.f32 %v642, 20.0
    %v647 = vmul.f32 %v646, 1.442695
    %v648 = vpow.pop %v647
    %v649 = vadd.f32 %v648, 1.0
    %v650 = vlog2.pop %v649
    %v651 = vmul.f32 %v650, 0.6931472
    %v652 = vmul.f32 -0.5, %v648
    %v653 = vadd.f32 %v652, 1.0
    %v654 = vmul.f32 %v653, %v648
    %v655 = vand.u32 2147483647, %v648
    %vm656 = vcmp.lt.f32.partialorder %v655, 0.0004427343
    %v657 = vsel %vm656, %v654, %v651
    %v658 = vsel %vm645, %v642, %v657
    %v659 = vmul.f32 %v658, 0.5
    %v660 = vmul.f32 %v659, 1.442695
    %v661 = vpow.pop %v660
    %v662 = vmul.f32 %v661, %v385
    %664 = vrot.lane.b32.xlu0 %v662, 112
    %v665 = vpop.permute.xlu0 %664
    %v667 = vadd.f32 %v642, %v665
    %668 = vst.msk [vmem:[#allocation11] sm:$0xff] %vm401, %v363
    %vm669 = vcmask 130112
    %670 = vst.msk [vmem:[#allocation11] sm:$0xff] %vm669, %v379
    %672 = vrot.lane.b32.xlu0 %v642, 16
    %v673 = vpop.permute.xlu0 %672
    %vm675 = vcmask 261248
    %676 = vst.msk [vmem:[#allocation11] sm:$0xff] %vm675, %v673
    %678 = vrot.lane.b32.xlu0 %v658, 16
    %v679 = vpop.permute.xlu0 %678
    %vm681 = vcmask 392448
    %682 = vst.msk [vmem:[#allocation11] sm:$0xff] %vm681, %v679
    %684 = vrot.lane.b32.xlu0 %v667, 48
    %v685 = vpop.permute.xlu0 %684
    %vm687 = vcmask 523648
    %688 = vst.msk [vmem:[#allocation11] sm:$0xff] %vm687, %v685
    // Predicated region
    $region78: #{tpu_custom_call.1} parent=1 // pred_check
      _
    $region79: #{tpu_custom_call.1} parent=1 // pred_check_branch
      %690 = sbr.rel (0) target = $region81
    $region80: #{tpu_custom_call.1} parent=1 // pred_region
      %s692 = ssub.s32 128, 128
      %693 = vsyncadd [#allocation4], %s692
      %s695 = sshll.u32 [#allocation11], 4
      %s696 = int_to_ptr.vmem [resolvable:$true] %s695
      %698 = dma.vmem_to_hbm [thread:$0]  %s696, 128, %s14, [#allocation4]
    $region81: #{tpu_custom_call.1} parent=1 // pred_fallthru
      _
    // Predicated region
    $region82: #{tpu_custom_call.1} parent=1 // pred_check
      _
    $region83: #{tpu_custom_call.1} parent=1 // pred_check_branch
      %700 = sbr.rel (0) target = $region85
    $region84: #{tpu_custom_call.1} parent=1 // pred_region
      %701 = dma.done [#allocation4], 128
    $region85: #{tpu_custom_call.1} parent=1 // pred_fallthru
      _
    %702 = vsyncpa [#allocation3], 1
    %703 = vsyncpa [#allocation6], 1
    %704 = vsyncpa [#allocation9], 1
    %705 = vsyncpa [#allocation4], 1

</llo_original>
